<compile_context>
chip_gen: v7x
topology: tpu7x:2x2x1
jax: 0.10.0
libtpu: 0.0.40
codegen_flags: <defaults>
</compile_context>

<pallas_src>
import functools
import math

import jax
import jax.numpy as jnp
from jax import lax
from jax.experimental import pallas as pl
from jax.experimental.pallas import tpu as pltpu


# ---------------------------------------------------------------------------
# Parameter (buffer) construction — deterministic, matches torch __init__.
# ---------------------------------------------------------------------------
def make_pe(d_model: int, max_len: int) -> jnp.ndarray:
    position = jnp.arange(max_len, dtype=jnp.float32)[:, None]            # [L, 1]
    div_term = jnp.exp(
        jnp.arange(0, d_model, 2, dtype=jnp.float32)
        * (-math.log(10000.0) / d_model)
    )                                                                      # [D/2]
    angles = position * div_term                                           # [L, D/2]
    pe = jnp.zeros((max_len, 1, d_model), dtype=jnp.float32)
    pe = pe.at[:, 0, 0::2].set(jnp.sin(angles))
    pe = pe.at[:, 0, 1::2].set(jnp.cos(angles))
    return pe


# ---------------------------------------------------------------------------
# Pallas kernels
# ---------------------------------------------------------------------------
def _pe_add_kernel(x_ref, pe_ref, o_ref, *, B):
    # x_ref: (ts, B*D), pe_ref: (ts, D) -> tile pe across the batch chunks.
    pe_t = jnp.tile(pe_ref[...], (1, B))            # (ts, B*D)
    o_ref[...] = x_ref[...] + pe_t


def _mix32(h):
    # splitmix32-style finalizer (uint32, wrapping arithmetic).
    h = h ^ (h >> 16)
    h = h * jnp.uint32(0x7FEB352D)
    h = h ^ (h >> 15)
    h = h * jnp.uint32(0x846CA68B)
    h = h ^ (h >> 16)
    return h


def _pe_add_dropout_kernel(seed_ref, x_ref, pe_ref, o_ref, *,
                           B, dropout_p, block_rows):
    pe_t = jnp.tile(pe_ref[...], (1, B))            # (ts, B*D)
    y = x_ref[...] + pe_t                           # (ts, B*D)

    rows, cols = y.shape
    base = pl.program_id(0) * block_rows            # global row offset of this tile
    r = (lax.broadcasted_iota(jnp.int32, (rows, cols), 0) + base).astype(jnp.uint32)
    c = lax.broadcasted_iota(jnp.int32, (rows, cols), 1).astype(jnp.uint32)
    seed = seed_ref[0].astype(jnp.uint32)

    # Grid-invariant hash: depends only on (global row, col, seed), so the
    # dropout mask does not change if the tiling changes.
    h = _mix32(r * jnp.uint32(0x9E3779B1) + c * jnp.uint32(0x85EBCA77) + seed)

    threshold = jnp.uint32(min(int(round(dropout_p * (2.0 ** 32))), 2 ** 32 - 1))
    keep = h >= threshold                           # single unsigned compare
    scale = jnp.float32(1.0 / (1.0 - dropout_p))
    o_ref[...] = jnp.where(keep, y * scale, jnp.zeros_like(y))


# ---------------------------------------------------------------------------
# Wrapper
# ---------------------------------------------------------------------------
_VMEM_BUDGET_BYTES = 20 * 1024 * 1024   # double-buffered working-set target
_VMEM_LIMIT_BYTES = 40 * 1024 * 1024    # < v7x 64 MiB physical; >> v5e 16 MiB default


def _pick_block_rows(S, B, D):
    # per-row f32 bytes for: x tile + out tile + pe tile
    row_bytes = (2 * B * D + D) * 4
    ts = _VMEM_BUDGET_BYTES // (2 * row_bytes)      # /2 for double buffering
    ts = max(8, (ts // 8) * 8)                      # sublane-aligned
    if ts >= S:
        return S                                    # single full-extent block
    return ts


def positional_encoding(x, pe, *, dropout_p=0.1, training=False, seed=0):
    """x: [S, B, D] float32, pe: [max_len, 1, D] float32."""
    S, B, D = x.shape
    assert pe.shape[0] >= S and pe.shape[2] == D
    assert 0.0 <= dropout_p < 1.0

    # Lane-dense flattened views (contiguous reshapes, no data movement).
    x2 = x.reshape(S, B * D)
    pe2 = pe.reshape(pe.shape[0], D)                # full buffer; BlockSpec picks rows

    ts = _pick_block_rows(S, B, D)
    grid = (pl.cdiv(S, ts),)

    compiler_params = pltpu.CompilerParams(
        dimension_semantics=("parallel",),          # shard across v7x TensorCores
        vmem_limit_bytes=_VMEM_LIMIT_BYTES,
    )

    if (not training) or dropout_p == 0.0:
        out2 = pl.pallas_call(
            functools.partial(_pe_add_kernel, B=B),
            out_shape=jax.ShapeDtypeStruct((S, B * D), x.dtype),
            grid_spec=pltpu.PrefetchScalarGridSpec(
                num_scalar_prefetch=0,
                grid=grid,
                in_specs=[
                    pl.BlockSpec((ts, B * D), lambda i: (i, 0)),
                    pl.BlockSpec((ts, D), lambda i: (i, 0)),
                ],
                out_specs=pl.BlockSpec((ts, B * D), lambda i: (i, 0)),
            ),
            compiler_params=compiler_params,
        )(x2, pe2)
        return out2.reshape(S, B, D)

    # Training path: in-kernel inverted dropout via integer-threshold hash.
    # TODO(synk): not bit-identical to torch.nn.Dropout's RNG stream.
    seed_arr = jnp.array([seed], dtype=jnp.int32)
    kernel = functools.partial(
        _pe_add_dropout_kernel, B=B, dropout_p=float(dropout_p), block_rows=ts
    )
    out2 = pl.pallas_call(
        kernel,
        out_shape=jax.ShapeDtypeStruct((S, B * D), x.dtype),
        grid_spec=pltpu.PrefetchScalarGridSpec(
            num_scalar_prefetch=1,
            grid=grid,
            in_specs=[
                pl.BlockSpec((ts, B * D), lambda i, sref: (i, 0)),
                pl.BlockSpec((ts, D), lambda i, sref: (i, 0)),
            ],
            out_specs=pl.BlockSpec((ts, B * D), lambda i, sref: (i, 0)),
        ),
        compiler_params=compiler_params,
    )(seed_arr, x2, pe2)
    return out2.reshape(S, B, D)


# ---------------------------------------------------------------------------
# Demo / self-check
# ---------------------------------------------------------------------------
if __name__ == "__main__":
    key = jax.random.PRNGKey(0)
    S, B, D = 8, 2, 32          # small seq / batch / d_model
    MAX_LEN = 16

    x = jax.random.normal(key, (S, B, D), dtype=jnp.float32)
    pe = make_pe(D, MAX_LEN)
    ref = x + pe[:S]            # plain-JAX reference (eval semantics)

    # eval-mode forward (dropout = identity)
    out_eval = positional_encoding(x, pe, dropout_p=0.1, training=False)
    out_eval = jax.block_until_ready(out_eval)
    assert out_eval.shape == (S, B, D)
    assert jnp.allclose(out_eval, ref, atol=1e-6, rtol=1e-6), "eval path mismatch"

    # training-mode forward (exercise the in-kernel dropout path)
    p = 0.1
    out_train = positional_encoding(x, pe, dropout_p=p, training=True, seed=42)
    out_train = jax.block_until_ready(out_train)
    assert out_train.shape == (S, B, D)

    # Every element must be either exactly 0 (dropped) or (x+pe)/(1-p) (kept).
    scaled_ref = ref / (1.0 - p)
    is_zero = out_train == 0.0
    is_kept = jnp.isclose(out_train, scaled_ref, atol=1e-5, rtol=1e-5)
    assert bool(jnp.all(is_zero | is_kept)), "train path mismatch"
    n_dropped = int(jnp.sum(is_zero & ~is_kept))
    assert 0 < n_dropped < S * B * D, "dropout mask looks degenerate"

    print("KERNEL_OK")
</pallas_src>

<mosaic_0001>
module attributes {stable_mosaic.version = 11 : i64} {
  func.func @_pe_add_kernel(%arg0: i32, %arg1: memref<8x64xf32, #tpu.memory_space<vmem>>, %arg2: memref<8x32xf32, #tpu.memory_space<vmem>>, %arg3: memref<8x64xf32, #tpu.memory_space<vmem>>) attributes {dimension_semantics = [#tpu.dimension_semantics<parallel>], iteration_bounds = array<i64: 1>, scalar_prefetch = 0 : i64, scratch_operands = 0 : i64, tpu.core_type = #tpu.core_type<tc>, window_params = [{transform_indices = @transform_0, window_bounds = array<i64: 8, 64>}, {transform_indices = @transform_1, window_bounds = array<i64: 8, 32>}, {transform_indices = @transform_2, window_bounds = array<i64: 8, 64>}]} {
    %c0 = arith.constant 0 : index
    %c0_0 = arith.constant 0 : index
    %0 = vector.load %arg2[%c0, %c0_0] : memref<8x32xf32, #tpu.memory_space<vmem>>, vector<8x32xf32>
    %1 = tpu.concatenate %0, %0 in 1 : vector<8x32xf32>, vector<8x32xf32> -> vector<8x64xf32>
    %c0_1 = arith.constant 0 : index
    %c0_2 = arith.constant 0 : index
    %2 = vector.load %arg1[%c0_1, %c0_2] : memref<8x64xf32, #tpu.memory_space<vmem>>, vector<8x64xf32>
    %3 = arith.addf %2, %1 : vector<8x64xf32>
    %c0_3 = arith.constant 0 : index
    %c0_4 = arith.constant 0 : index
    %4 = vector.load %arg3[%c0_3, %c0_4] : memref<8x64xf32, #tpu.memory_space<vmem>>, vector<8x64xf32>
    tpu.vector_store %arg3[%c0_3, %c0_4], %3 {strides = array<i32>} : memref<8x64xf32, #tpu.memory_space<vmem>>, vector<8x64xf32>,
    return
  }
  func.func @transform_0(%arg0: i32) -> (i32, i32) {
    %c0_i32 = arith.constant 0 : i32
    %c0_i32_0 = arith.constant 0 : i32
    return %arg0, %c0_i32 : i32, i32
  }
  func.func @transform_1(%arg0: i32) -> (i32, i32) {
    %c0_i32 = arith.constant 0 : i32
    %c0_i32_0 = arith.constant 0 : i32
    return %arg0, %c0_i32 : i32, i32
  }
  func.func @transform_2(%arg0: i32) -> (i32, i32) {
    %c0_i32 = arith.constant 0 : i32
    %c0_i32_0 = arith.constant 0 : i32
    return %arg0, %c0_i32 : i32, i32
  }
}

</mosaic_0001>

<llo_original>
// kernel: tpu_custom_call.1
$region0: #{tpu_custom_call.1}
  #allocation0 [shape = 'u32[]', space=smem, size = 0x4, offset = 0x4, fixed_abs, tag = 'smem constant byte address 0x4 - core index']
  #allocation1 [shape = 'u32[144,128]{1,0:T(1,128)}', space=vmem, size = 0x12000, scoped, tag = 'internal scratch']
  %s0 = inlined_call_operand.hbm [shape: f32[8,64], index: 0, kind: input, shape index: {}]
  %s1 = inlined_call_operand.hbm [shape: f32[16,32], index: 1, kind: input, shape index: {}]
  %s2 = inlined_call_operand.hbm [shape: f32[8,64], index: 2, kind: output, shape index: {}]
  %s3 = sld [smem:[#allocation0]]
  $region26: #{tpu_custom_call.1} parent=0
    _
  %s5 = ssub.s32 1, %s3
  %s6 = scalar_select 0, %s5, %s3
  $region1: #{tpu_custom_call.1} parent=0
    #allocation2 [shape = 'u8[4096]{0}', space=vmem, size = 0x1000, scoped, tag = 'input window, operand 0, single buffered']
    #allocation3 [shape = 's32[1]{0}', space=sflag, size = 0x4, scoped, tag = 'scoped memory for tpu_custom_call.1']
    #allocation4 [shape = 's32[1]{0}', space=sflag, size = 0x4, scoped, tag = 'scoped memory for tpu_custom_call.1']
    #allocation5 [shape = 'u8[4096]{0}', space=vmem, size = 0x1000, scoped, tag = 'input window, operand 1, single buffered']
    #allocation6 [shape = 's32[1]{0}', space=sflag, size = 0x4, scoped, tag = 'scoped memory for tpu_custom_call.1']
    #allocation7 [shape = 'u8[4096]{0}', space=vmem, size = 0x1000, scoped, tag = 'output window, operand 0, single buffered']
    %7 = vsyncpa [#allocation3], 0
    %8 = vsyncpa [#allocation6], 0
    %9 = vsyncpa [#allocation4], 0
    // Predicated region
    $region2: #{tpu_custom_call.1} parent=1 // pred_check
      _
    $region3: #{tpu_custom_call.1} parent=1 // pred_check_branch
      %11 = sbr.rel (0) target = $region5
    $region4: #{tpu_custom_call.1} parent=1 // pred_region
      %s13 = ssub.s32 128, 128
      %14 = vsyncadd [#allocation3], %s13
      %s16 = sshll.u32 [#allocation2], 4
      %s17 = int_to_ptr.vmem [resolvable:$true] %s16
      %19 = dma.hbm_to_vmem [thread:$0]  %s0, 128, %s17, [#allocation3]
    $region5: #{tpu_custom_call.1} parent=1 // pred_fallthru
      _
    // Predicated region
    $region6: #{tpu_custom_call.1} parent=1 // pred_check
      _
    $region7: #{tpu_custom_call.1} parent=1 // pred_check_branch
      %21 = sbr.rel (0) target = $region9
    $region8: #{tpu_custom_call.1} parent=1 // pred_region
      %s23 = ssub.s32 128, 128
      %24 = vsyncadd [#allocation6], %s23
      %s26 = sshll.u32 [#allocation5], 4
      %s27 = int_to_ptr.vmem [resolvable:$true] %s26
      %29 = dma.hbm_to_vmem [thread:$0]  %s1, 128, %s27, [#allocation6]
    $region9: #{tpu_custom_call.1} parent=1 // pred_fallthru
      _
    // Predicated region
    $region10: #{tpu_custom_call.1} parent=1 // pred_check
      _
    $region11: #{tpu_custom_call.1} parent=1 // pred_check_branch
      %31 = sbr.rel (0) target = $region13
    $region12: #{tpu_custom_call.1} parent=1 // pred_region
      %32 = dma.done [#allocation3], 128
    $region13: #{tpu_custom_call.1} parent=1 // pred_fallthru
      _
    // Predicated region
    $region14: #{tpu_custom_call.1} parent=1 // pred_check
      _
    $region15: #{tpu_custom_call.1} parent=1 // pred_check_branch
      %34 = sbr.rel (0) target = $region17
    $region16: #{tpu_custom_call.1} parent=1 // pred_region
      %35 = dma.done [#allocation6], 128
    $region17: #{tpu_custom_call.1} parent=1 // pred_fallthru
      _
    %v36 = vld [vmem:[#allocation5] sm:$0xff]
    %38 = vrot.lane.b32.xlu0 %v36, 32
    %v39 = vpop.permute.xlu0 %38
    %vm41 = vcmask 261120
    %v42 = vsel %vm41, %v36, %v39
    %v43 = vld [vmem:[#allocation2] sm:$0xff]
    %v44 = vadd.f32 %v43, %v42
    %vm45 = vcmask 523264
    %46 = vst.msk [vmem:[#allocation7] sm:$0xff] %vm45, %v44
    // Predicated region
    $region18: #{tpu_custom_call.1} parent=1 // pred_check
      _
    $region19: #{tpu_custom_call.1} parent=1 // pred_check_branch
      %48 = sbr.rel (0) target = $region21
    $region20: #{tpu_custom_call.1} parent=1 // pred_region
      %s50 = ssub.s32 128, 128
      %51 = vsyncadd [#allocation4], %s50
      %s53 = sshll.u32 [#allocation7], 4
      %s54 = int_to_ptr.vmem [resolvable:$true] %s53
      %56 = dma.vmem_to_hbm [thread:$0]  %s54, 128, %s2, [#allocation4]
    $region21: #{tpu_custom_call.1} parent=1 // pred_fallthru
      _
    // Predicated region
    $region22: #{tpu_custom_call.1} parent=1 // pred_check
      _
    $region23: #{tpu_custom_call.1} parent=1 // pred_check_branch
      %58 = sbr.rel (0) target = $region25
    $region24: #{tpu_custom_call.1} parent=1 // pred_region
      %59 = dma.done [#allocation4], 128
    $region25: #{tpu_custom_call.1} parent=1 // pred_fallthru
      _
    %60 = vsyncpa [#allocation3], 1
    %61 = vsyncpa [#allocation6], 1
    %62 = vsyncpa [#allocation4], 1

</llo_original>
